<compile_context>
chip_gen: v7x
topology: tpu7x:2x2x1
jax: 0.10.0
libtpu: 0.0.40
codegen_flags: <defaults>
</compile_context>

<pallas_src>
import functools
import math

import jax
import jax.numpy as jnp
from jax.experimental import pallas as pl
from jax.experimental.pallas import tpu as pltpu

_MiB = 1024 * 1024


# ----------------------------------------------------------------------------
# Kernels
# ----------------------------------------------------------------------------
def _glu_kernel_resident(x_ref, wgu_ref, wd_ref, o_ref, *, i_pad):
    """Weights fully VMEM-resident; gate/up as two dots against ref slices."""
    x = x_ref[...]
    gate = jnp.dot(x, wgu_ref[:, :i_pad], preferred_element_type=jnp.float32)
    up = jnp.dot(x, wgu_ref[:, i_pad:], preferred_element_type=jnp.float32)
    h = up * (gate * jax.nn.sigmoid(gate))            # SiLU(gate) * up
    o_ref[...] = jnp.dot(h.astype(wd_ref.dtype), wd_ref[...],
                         preferred_element_type=jnp.float32).astype(o_ref.dtype)


def _glu_kernel_tiled(x_ref, wg_ref, wu_ref, wd_ref, o_ref, acc_ref):
    """Intermediate dim tiled on the last ("arbitrary") grid axis, f32 accumulator."""
    k = pl.program_id(1)

    @pl.when(k == 0)
    def _():
        acc_ref[...] = jnp.zeros_like(acc_ref)

    x = x_ref[...]
    gate = jnp.dot(x, wg_ref[...], preferred_element_type=jnp.float32)
    up = jnp.dot(x, wu_ref[...], preferred_element_type=jnp.float32)
    h = up * (gate * jax.nn.sigmoid(gate))
    acc_ref[...] += jnp.dot(h.astype(wd_ref.dtype), wd_ref[...],
                            preferred_element_type=jnp.float32)

    @pl.when(k == pl.num_programs(1) - 1)
    def _():
        o_ref[...] = acc_ref[...].astype(o_ref.dtype)


# ----------------------------------------------------------------------------
# Helpers
# ----------------------------------------------------------------------------
def _round_up(n, m):
    return ((n + m - 1) // m) * m


def _cdiv(a, b):
    return -(-a // b)


def _balanced_tm(m, cap):
    """Row tile <= ~cap that bounds padding waste to < 1 tile (multiple of 8)."""
    cap = max(8, _round_up(cap, 8))
    n_tiles = max(1, _cdiv(m, cap))
    return max(8, _round_up(_cdiv(m, n_tiles), 8))


def _block_spec(shape, index_map, buffer_count=None):
    """BlockSpec with optional pipeline_mode=pl.Buffered(n); safe fallback."""
    if buffer_count is not None and hasattr(pl, "Buffered"):
        try:
            return pl.BlockSpec(shape, index_map,
                                pipeline_mode=pl.Buffered(buffer_count))
        except TypeError:
            pass
    return pl.BlockSpec(shape, index_map)


def _vmem_limits():
    """(vmem_limit_bytes, is_small_vmem_chip) derived from the hardware."""
    cap = None
    try:
        cap = int(pltpu.get_tpu_info().vmem_capacity_bytes)
    except Exception:
        cap = None
    if cap is None or cap <= 0:
        try:
            kind = jax.devices()[0].device_kind.lower()
        except Exception:
            kind = ""
        cap = 128 * _MiB if ("v5" in kind or "v6" in kind or "v4" in kind) else 64 * _MiB
    if cap >= 120 * _MiB:           # v5e / v6e: 128 MiB physical VMEM
        return 112 * _MiB, False
    # v7x-like: 64 MiB physical per TC -> leave headroom for compiler scratch.
    return min(cap, 52 * _MiB), True


def _resident_vmem_bytes(tm, d_in, i_pad, tn, n_tiles, dsize):
    x_b = 2 * tm * d_in * dsize                       # double-buffered x tile
    o_b = 2 * tm * tn * dsize                         # double-buffered out tile
    wgu_b = d_in * 2 * i_pad * dsize                  # Buffered(1): single copy
    wd_b = (1 if n_tiles == 1 else 2) * i_pad * tn * dsize
    tmp = 2 * tm * i_pad * 4 + tm * tn * 4            # gate/up f32 + f32 out temp
    return x_b + o_b + wgu_b + wd_b + tmp


def _tiled_vmem_bytes(tm, ti, d_in, d_out_pad, dsize):
    x_b = 2 * tm * d_in * dsize
    o_b = 2 * tm * d_out_pad * dsize
    w_b = 2 * (2 * d_in * ti + ti * d_out_pad) * dsize  # streamed, double-buffered
    acc = tm * d_out_pad * 4
    tmp = 3 * tm * ti * 4
    return x_b + o_b + w_b + acc + tmp


def _ti_candidates(i_pad, cap=2048):
    """128-multiples that divide i_pad (so one padded weight works for all ti)."""
    q = i_pad // 128
    cands = [128 * d for d in range(1, q + 1) if q % d == 0 and 128 * d <= cap]
    if not cands:
        cands = [128]
    return sorted(set(cands), reverse=True)


def glu_prepare_weights(w_fused, w_down):
    """Pad weights once (hoist out of the per-call hot path).

    Padding is a no-op (no HBM copy) when I and D_out are already 128-aligned.
    Zero-padded gate/up columns give silu(0)*0 = 0 and padded down-proj rows are
    zero, so the result is exact.
    """
    d_in, two_i = w_fused.shape
    inter = two_i // 2
    i_down, d_out = w_down.shape
    assert i_down == inter, "w_down first dim must equal intermediate dim"
    i_pad = _round_up(inter, 128)
    d_out_pad = _round_up(d_out, 128)
    if i_pad == inter:
        w_fused_p = w_fused
    else:
        w_fused_p = jnp.zeros((d_in, 2 * i_pad), w_fused.dtype)
        w_fused_p = w_fused_p.at[:, :inter].set(w_fused[:, :inter])
        w_fused_p = w_fused_p.at[:, i_pad:i_pad + inter].set(w_fused[:, inter:])
    if i_pad == inter and d_out_pad == d_out:
        w_down_p = w_down
    else:
        w_down_p = jnp.zeros((i_pad, d_out_pad), w_down.dtype)
        w_down_p = w_down_p.at[:inter, :d_out].set(w_down)
    return dict(w_fused=w_fused_p, w_down=w_down_p, d_in=d_in,
                inter=inter, i_pad=i_pad, d_out=d_out, d_out_pad=d_out_pad)


# ----------------------------------------------------------------------------
# Wrapper
# ----------------------------------------------------------------------------
def glu_forward(x, w_fused=None, w_down=None, *, prepared=None, tm=None, ti=None,
                force_tiled=False, vmem_limit_bytes=None):
    """x: (..., D_in); w_fused: (D_in, 2*I); w_down: (I, D_out).

    Pass `prepared=glu_prepare_weights(w_fused, w_down)` to hoist the one-time
    weight padding out of the hot path.
    """
    if prepared is None:
        prepared = glu_prepare_weights(w_fused, w_down)
    w_fused_p = prepared["w_fused"]
    w_down_p = prepared["w_down"]
    d_in = prepared["d_in"]
    i_pad = prepared["i_pad"]
    d_out = prepared["d_out"]
    d_out_pad = prepared["d_out_pad"]

    orig_shape = x.shape
    assert orig_shape[-1] == d_in, "x last dim must equal input_dim"
    dtype = x.dtype
    dsize = jnp.dtype(dtype).itemsize
    m = math.prod(orig_shape[:-1]) if len(orig_shape) > 1 else 1

    limit_auto, small_vmem = _vmem_limits()
    limit = int(vmem_limit_bytes) if vmem_limit_bytes is not None else limit_auto
    budget = int((0.70 if small_vmem else 0.75) * limit)

    # Row tiles (balanced -> padding waste < 1 tile).
    if tm is None:
        res_cap = 256 if (small_vmem and (d_in >= 4096 or d_out_pad >= 4096)) else 512
        tiled_cap = 512 if small_vmem else 1024   # larger tm keeps v6e tiled path MXU-bound
        tm_res = _balanced_tm(m, res_cap)
        tm_til = _balanced_tm(m, tiled_cap)
    else:
        tm_res = tm_til = max(8, _round_up(tm, 8))

    # ---- resident-path configuration -------------------------------------
    m_pad_res = _round_up(m, tm_res)
    m_tiles_res = m_pad_res // tm_res
    n_tiles, tn = 1, d_out_pad
    if (small_vmem and m_tiles_res == 1 and d_out_pad >= 256
            and (d_out_pad // 128) % 2 == 0):
        # Give the 2nd TensorCore work on small-M (decode) shapes (v7x).
        n_tiles, tn = 2, d_out_pad // 2

    use_tiled = (
        force_tiled
        or (ti is not None)
        or _resident_vmem_bytes(tm_res, d_in, i_pad, tn, n_tiles, dsize) > budget
    )

    if not use_tiled:
        # -------- weight-resident path: grid over rows (x N split) ---------
        tm_sel = tm_res
        m_pad = m_pad_res
        x2d = x.reshape(m, d_in)
        if m_pad != m:
            x2d = jnp.pad(x2d, ((0, m_pad - m), (0, 0)))
        kernel = functools.partial(_glu_kernel_resident, i_pad=i_pad)
        out2d = pl.pallas_call(
            kernel,
            out_shape=jax.ShapeDtypeStruct((m_pad, d_out_pad), dtype),
            grid_spec=pltpu.PrefetchScalarGridSpec(
                num_scalar_prefetch=0,
                grid=(m_pad // tm_sel, n_tiles),
                in_specs=[
                    pl.BlockSpec((tm_sel, d_in), lambda i, j: (i, 0)),
                    # Constant-index weight blocks: single-buffered (halves VMEM).
                    _block_spec((d_in, 2 * i_pad), lambda i, j: (0, 0),
                                buffer_count=1),
                    _block_spec((i_pad, tn), lambda i, j: (0, j),
                                buffer_count=1 if n_tiles == 1 else None),
                ],
                out_specs=pl.BlockSpec((tm_sel, tn), lambda i, j: (i, j)),
            ),
            compiler_params=pltpu.CompilerParams(
                dimension_semantics=("parallel", "parallel"),
                vmem_limit_bytes=limit),
        )(x2d, w_fused_p, w_down_p)
    else:
        # -------- I-tiled path: rows x intermediate-tiles grid -------------
        tm_sel = tm_til
        cands = _ti_candidates(i_pad)
        if ti is not None:
            want = max(128, _round_up(ti, 128))
            fits = [c for c in cands if c <= want]
            cands = fits if fits else [cands[-1]]

        def _pick_ti(tm_):
            for c in cands:
                if _tiled_vmem_bytes(tm_, c, d_in, d_out_pad, dsize) <= budget:
                    return c
            return None

        ti_sel = _pick_ti(tm_sel)
        while ti_sel is None and tm_sel > 64:
            # Shrink tm too (not just ti) so large d_in/d_out stays viable on v7x.
            tm_sel = max(64, _round_up(tm_sel // 2, 8))
            ti_sel = _pick_ti(tm_sel)
        if ti_sel is None:
            ti_sel = cands[-1]   # smallest tile; launch anyway

        n_k = i_pad // ti_sel
        m_pad = _round_up(m, tm_sel)
        x2d = x.reshape(m, d_in)
        if m_pad != m:
            x2d = jnp.pad(x2d, ((0, m_pad - m), (0, 0)))

        # NOTE: if the k-step weight DMA is still exposed on v6e, Buffered(3)
        # on the streamed weight specs is the next lever (needs VMEM headroom).
        out2d = pl.pallas_call(
            _glu_kernel_tiled,
            out_shape=jax.ShapeDtypeStruct((m_pad, d_out_pad), dtype),
            grid_spec=pltpu.PrefetchScalarGridSpec(
                num_scalar_prefetch=0,
                grid=(m_pad // tm_sel, n_k),
                in_specs=[
                    pl.BlockSpec((tm_sel, d_in), lambda i, k: (i, 0)),
                    # gate columns of the fused weight
                    pl.BlockSpec((d_in, ti_sel), lambda i, k: (0, k)),
                    # up columns of the SAME fused weight (column offset I_pad)
                    pl.BlockSpec((d_in, ti_sel), lambda i, k: (0, n_k + k)),
                    pl.BlockSpec((ti_sel, d_out_pad), lambda i, k: (k, 0)),
                ],
                out_specs=pl.BlockSpec((tm_sel, d_out_pad), lambda i, k: (i, 0)),
                scratch_shapes=[pltpu.VMEM((tm_sel, d_out_pad), jnp.float32)],
            ),
            compiler_params=pltpu.CompilerParams(
                dimension_semantics=("parallel", "arbitrary"),
                vmem_limit_bytes=limit),
        )(x2d, w_fused_p, w_fused_p, w_down_p)   # same fused buffer twice, no copy

    out = out2d[:m, :d_out]
    return out.reshape(*orig_shape[:-1], d_out)


# ----------------------------------------------------------------------------
# Demo / correctness check
# ----------------------------------------------------------------------------
if __name__ == "__main__":
    batch, seq = 2, 8
    input_dim, intermediate_dim, output_dim = 32, 64, 32

    key = jax.random.PRNGKey(0)
    k_x, k_fused, k_down = jax.random.split(key, 3)

    x = jax.random.normal(k_x, (batch, seq, input_dim), dtype=jnp.float32)
    w_fused = jax.random.normal(
        k_fused, (input_dim, 2 * intermediate_dim), dtype=jnp.float32) * 0.05
    w_down = jax.random.normal(
        k_down, (intermediate_dim, output_dim), dtype=jnp.float32) * 0.05

    def glu_reference(xx, wf, wd):
        ii = wf.shape[-1] // 2
        fused = xx @ wf
        gate, up = fused[..., :ii], fused[..., ii:]
        return (jax.nn.silu(gate) * up) @ wd

    ref = glu_reference(x, w_fused, w_down)

    # 1) Default (weight-resident) path.
    out = glu_forward(x, w_fused, w_down)
    jax.block_until_ready(out)
    assert out.shape == ref.shape
    assert jnp.allclose(out, ref, atol=1e-4, rtol=1e-4), "resident path mismatch"

    # 2) I-tiled accumulator path (forced) -- the large-model code path.
    out_t = glu_forward(x, w_fused, w_down, force_tiled=True, ti=128)
    jax.block_until_ready(out_t)
    assert jnp.allclose(out_t, ref, atol=1e-4, rtol=1e-4), "tiled path mismatch"

    # 3) Ragged row count -> exercises balanced row tiling / padding.
    x_odd = x[:, : seq - 1, :]
    out_o = glu_forward(x_odd, w_fused, w_down)
    jax.block_until_ready(out_o)
    assert jnp.allclose(out_o, glu_reference(x_odd, w_fused, w_down),
                        atol=1e-4, rtol=1e-4), "padded-rows mismatch"

    # 4) Pre-padded weights (hoisted out of the hot path).
    prep = glu_prepare_weights(w_fused, w_down)
    out_p = glu_forward(x, prepared=prep)
    jax.block_until_ready(out_p)
    assert jnp.allclose(out_p, ref, atol=1e-4, rtol=1e-4), "prepared-weights mismatch"

    print("KERNEL_OK")
</pallas_src>

<mosaic_0001>
module attributes {stable_mosaic.version = 11 : i64} {
  func.func @_glu_kernel_resident(%arg0: i32, %arg1: i32, %arg2: memref<16x32xf32, #tpu.memory_space<vmem>>, %arg3: memref<32x256xf32, #tpu.memory_space<vmem>>, %arg4: memref<128x128xf32, #tpu.memory_space<vmem>>, %arg5: memref<16x128xf32, #tpu.memory_space<vmem>>) attributes {dimension_semantics = [#tpu.dimension_semantics<parallel>, #tpu.dimension_semantics<parallel>], iteration_bounds = array<i64: 1, 1>, scalar_prefetch = 0 : i64, scratch_operands = 0 : i64, tpu.core_type = #tpu.core_type<tc>, window_params = [{transform_indices = @transform_0, window_bounds = array<i64: 16, 32>}, {pipeline_mode = #tpu.pipeline_mode<synchronous>, transform_indices = @transform_1, window_bounds = array<i64: 32, 256>}, {pipeline_mode = #tpu.pipeline_mode<synchronous>, transform_indices = @transform_2, window_bounds = array<i64: 128, 128>}, {transform_indices = @transform_3, window_bounds = array<i64: 16, 128>}]} {
    %c0 = arith.constant 0 : index
    %c0_0 = arith.constant 0 : index
    %0 = vector.load %arg2[%c0, %c0_0] : memref<16x32xf32, #tpu.memory_space<vmem>>, vector<16x32xf32>
    %c0_1 = arith.constant 0 : index
    %c0_2 = arith.constant 0 : index
    %1 = vector.load %arg3[%c0_1, %c0_2] : memref<32x256xf32, #tpu.memory_space<vmem>>, vector<32x128xf32>
    %cst = arith.constant dense<0.000000e+00> : vector<16x128xf32>
    %2 = tpu.matmul %0, %1, %cst {dimension_numbers = #tpu.dot_dimension_numbers<[1], [0], [0], [1], [0, 0, 1, 1], [], []>} : vector<16x32xf32>, vector<32x128xf32>, vector<16x128xf32> -> vector<16x128xf32>
    %c0_3 = arith.constant 0 : index
    %c128 = arith.constant 128 : index
    %3 = vector.load %arg3[%c0_3, %c128] : memref<32x256xf32, #tpu.memory_space<vmem>>, vector<32x128xf32>
    %cst_4 = arith.constant dense<0.000000e+00> : vector<16x128xf32>
    %4 = tpu.matmul %0, %3, %cst_4 {dimension_numbers = #tpu.dot_dimension_numbers<[1], [0], [0], [1], [0, 0, 1, 1], [], []>} : vector<16x32xf32>, vector<32x128xf32>, vector<16x128xf32> -> vector<16x128xf32>
    %5 = arith.negf %2 : vector<16x128xf32>
    %6 = math.exp %5 : vector<16x128xf32>
    %cst_5 = arith.constant 1.000000e+00 : f32
    %7 = vector.broadcast %cst_5 : f32 to vector<16x128xf32>
    %8 = arith.addf %7, %6 : vector<16x128xf32>
    %9 = arith.divf %7, %8 : vector<16x128xf32>
    %10 = arith.mulf %2, %9 : vector<16x128xf32>
    %11 = arith.mulf %4, %10 : vector<16x128xf32>
    %c0_6 = arith.constant 0 : index
    %c0_7 = arith.constant 0 : index
    %12 = vector.load %arg4[%c0_6, %c0_7] : memref<128x128xf32, #tpu.memory_space<vmem>>, vector<128x128xf32>
    %cst_8 = arith.constant dense<0.000000e+00> : vector<16x128xf32>
    %13 = tpu.matmul %11, %12, %cst_8 {dimension_numbers = #tpu.dot_dimension_numbers<[1], [0], [0], [1], [0, 0, 1, 1], [], []>} : vector<16x128xf32>, vector<128x128xf32>, vector<16x128xf32> -> vector<16x128xf32>
    %c0_9 = arith.constant 0 : index
    %c0_10 = arith.constant 0 : index
    %14 = vector.load %arg5[%c0_9, %c0_10] : memref<16x128xf32, #tpu.memory_space<vmem>>, vector<16x128xf32>
    tpu.vector_store %arg5[%c0_9, %c0_10], %13 {strides = array<i32>} : memref<16x128xf32, #tpu.memory_space<vmem>>, vector<16x128xf32>,
    return
  }
  func.func @transform_0(%arg0: i32, %arg1: i32) -> (i32, i32) {
    %c0_i32 = arith.constant 0 : i32
    %c0_i32_0 = arith.constant 0 : i32
    return %arg0, %c0_i32 : i32, i32
  }
  func.func @transform_1(%arg0: i32, %arg1: i32) -> (i32, i32) {
    %c0_i32 = arith.constant 0 : i32
    %c0_i32_0 = arith.constant 0 : i32
    %c0_i32_1 = arith.constant 0 : i32
    return %c0_i32, %c0_i32_0 : i32, i32
  }
  func.func @transform_2(%arg0: i32, %arg1: i32) -> (i32, i32) {
    %c0_i32 = arith.constant 0 : i32
    %c0_i32_0 = arith.constant 0 : i32
    return %c0_i32, %arg1 : i32, i32
  }
  func.func @transform_3(%arg0: i32, %arg1: i32) -> (i32, i32) {
    %c0_i32 = arith.constant 0 : i32
    return %arg0, %arg1 : i32, i32
  }
}

</mosaic_0001>

<llo_original>
// kernel: tpu_custom_call.1
$region0: #{tpu_custom_call.1}
  #allocation0 [shape = 'u32[]', space=smem, size = 0x4, offset = 0x4, fixed_abs, tag = 'smem constant byte address 0x4 - core index']
  #allocation1 [shape = 'u32[144,128]{1,0:T(1,128)}', space=vmem, size = 0x12000, scoped, tag = 'internal scratch']
  %s0 = inlined_call_operand.hbm [shape: f32[16,32], index: 0, kind: input, shape index: {}]
  %s1 = inlined_call_operand.hbm [shape: f32[32,256], index: 1, kind: input, shape index: {}]
  %s2 = inlined_call_operand.hbm [shape: f32[128,128], index: 2, kind: input, shape index: {}]
  %s3 = inlined_call_operand.hbm [shape: f32[16,128], index: 3, kind: output, shape index: {}]
  %s4 = sld [smem:[#allocation0]]
  $region34: #{tpu_custom_call.1} parent=0
    _
  %s6 = ssub.s32 1, %s4
  %s7 = scalar_select 0, %s6, %s4
  $region1: #{tpu_custom_call.1} parent=0
    #allocation2 [shape = 'u8[8192]{0}', space=vmem, size = 0x2000, scoped, tag = 'input window, operand 0, single buffered']
    #allocation3 [shape = 's32[1]{0}', space=sflag, size = 0x4, scoped, tag = 'scoped memory for tpu_custom_call.1']
    #allocation4 [shape = 's32[1]{0}', space=sflag, size = 0x4, scoped, tag = 'scoped memory for tpu_custom_call.1']
    #allocation5 [shape = 'u8[32768]{0}', space=vmem, size = 0x8000, scoped, tag = 'input window, operand 1, single buffered']
    #allocation6 [shape = 's32[1]{0}', space=sflag, size = 0x4, scoped, tag = 'scoped memory for tpu_custom_call.1']
    #allocation7 [shape = 'u8[65536]{0}', space=vmem, size = 0x10000, scoped, tag = 'input window, operand 2, single buffered']
    #allocation8 [shape = 'u8[8192]{0}', space=vmem, size = 0x2000, scoped, tag = 'output window, operand 0, single buffered']
    %8 = vsyncpa [#allocation3], 0
    %9 = vsyncpa [#allocation6], 0
    %10 = vsyncpa [#allocation4], 0
    // Predicated region
    $region2: #{tpu_custom_call.1} parent=1 // pred_check
      _
    $region3: #{tpu_custom_call.1} parent=1 // pred_check_branch
      %12 = sbr.rel (0) target = $region5
    $region4: #{tpu_custom_call.1} parent=1 // pred_region
      %s14 = ssub.s32 256, 256
      %15 = vsyncadd [#allocation3], %s14
      %s16 = sshll.u32 [#allocation2], 4
      %s17 = int_to_ptr.vmem [resolvable:$true] %s16
      %22 = dma.hbm_to_vmem [thread:$0]  %s0, 256, %s17, [#allocation3], 128, 128, 8
    $region5: #{tpu_custom_call.1} parent=1 // pred_fallthru
      _
    // Predicated region
    $region6: #{tpu_custom_call.1} parent=1 // pred_check
      _
    $region7: #{tpu_custom_call.1} parent=1 // pred_check_branch
      %24 = sbr.rel (0) target = $region9
    $region8: #{tpu_custom_call.1} parent=1 // pred_region
      %s26 = ssub.s32 1024, 1024
      %27 = vsyncadd [#allocation6], %s26
      %s28 = sshll.u32 [#allocation5], 4
      %s29 = int_to_ptr.vmem [resolvable:$true] %s28
      %34 = dma.hbm_to_vmem [thread:$0]  %s1, 1024, %s29, [#allocation6], 256, 256, 16
    $region9: #{tpu_custom_call.1} parent=1 // pred_fallthru
      _
    // Predicated region
    $region10: #{tpu_custom_call.1} parent=1 // pred_check
      _
    $region11: #{tpu_custom_call.1} parent=1 // pred_check_branch
      %36 = sbr.rel (0) target = $region13
    $region12: #{tpu_custom_call.1} parent=1 // pred_region
      %s38 = ssub.s32 2048, 2048
      %39 = vsyncadd [#allocation6], %s38
      %s40 = sshll.u32 [#allocation7], 4
      %s41 = int_to_ptr.vmem [resolvable:$true] %s40
      %46 = dma.hbm_to_vmem [thread:$0]  %s2, 2048, %s41, [#allocation6], 128, 128, 8
    $region13: #{tpu_custom_call.1} parent=1 // pred_fallthru
      _
    // Predicated region
    $region14: #{tpu_custom_call.1} parent=1 // pred_check
      _
    $region15: #{tpu_custom_call.1} parent=1 // pred_check_branch
      %48 = sbr.rel (0) target = $region17
    $region16: #{tpu_custom_call.1} parent=1 // pred_region
      %49 = dma.done [#allocation3], 256
    $region17: #{tpu_custom_call.1} parent=1 // pred_fallthru
      _
    // Predicated region
    $region18: #{tpu_custom_call.1} parent=1 // pred_check
      _
    $region19: #{tpu_custom_call.1} parent=1 // pred_check_branch
      %51 = sbr.rel (0) target = $region21
    $region20: #{tpu_custom_call.1} parent=1 // pred_region
      %52 = dma.done [#allocation6], 1024
    $region21: #{tpu_custom_call.1} parent=1 // pred_fallthru
      _
    // Predicated region
    $region22: #{tpu_custom_call.1} parent=1 // pred_check
      _
    $region23: #{tpu_custom_call.1} parent=1 // pred_check_branch
      %54 = sbr.rel (0) target = $region25
    $region24: #{tpu_custom_call.1} parent=1 // pred_region
      %55 = dma.done [#allocation6], 2048
    $region25: #{tpu_custom_call.1} parent=1 // pred_fallthru
      _
    %v56 = vld [vmem:[#allocation2] sm:$0xff]
    %v57 = vld [vmem:[#allocation2 + $0x8] sm:$0xff]
    %v58 = vld [vmem:[#allocation5] sm:$0xff]
    %v59 = vld [vmem:[#allocation5 + $0x10] sm:$0xff]
    %v60 = vld [vmem:[#allocation5 + $0x20] sm:$0xff]
    %v61 = vld [vmem:[#allocation5 + $0x30] sm:$0xff]
    %vm62 = vcmask 261120
    %v64 = vsel %vm62, %v56, 0
    %v67 = vsel %vm62, %v57, 0
    %69 = vmatprep.subr.mxu0 0.0
    %70 = vmatpush1.msra.mxu0 %v58
    %71 = vmatprep.subr.mxu0 0.0
    %72 = vmatpush1.msra.mxu0 %v59
    %73 = vmatprep.subr.mxu0 0.0
    %74 = vmatpush1.msra.mxu0 %v60
    %75 = vmatprep.subr.mxu0 0.0
    %76 = vmatpush1.msra.mxu0 %v61
    %77 = vmatprep.subr.mxu0 0.0
    %78 = vmatpush1.msra.mxu0 0.0
    %79 = vmatprep.subr.mxu0 0.0
    %80 = vmatpush1.msra.mxu0 0.0
    %81 = vmatprep.subr.mxu0 0.0
    %82 = vmatpush1.msra.mxu0 0.0
    %83 = vmatprep.subr.mxu0 0.0
    %84 = vmatpush1.msra.mxu0 0.0
    %85 = vmatprep.subr.mxu0 0.0
    %86 = vmatpush1.msra.mxu0 0.0
    %87 = vmatprep.subr.mxu0 0.0
    %88 = vmatpush1.msra.mxu0 0.0
    %89 = vmatprep.subr.mxu0 0.0
    %90 = vmatpush1.msra.mxu0 0.0
    %91 = vmatprep.subr.mxu0 0.0
    %92 = vmatpush1.msra.mxu0 0.0
    %93 = vmatprep.subr.mxu0 0.0
    %94 = vmatpush1.msra.mxu0 0.0
    %95 = vmatprep.subr.mxu0 0.0
    %96 = vmatpush1.msra.mxu0 0.0
    %97 = vmatprep.subr.mxu0 0.0
    %98 = vmatpush1.msra.mxu0 0.0
    %99 = vmatprep.subr.mxu0 0.0
    %100 = vmatpush1.msra.mxu0 0.0
    %101 = vmatprep.subr.mxu0 0.0
    %102 = vmatpush1.msra.mxu0 0.0
    %103 = vmatprep.subr.mxu0 0.0
    %104 = vmatpush1.msra.mxu0 0.0
    %105 = vmatprep.subr.mxu0 0.0
    %106 = vmatpush1.msra.mxu0 0.0
    %107 = vmatprep.subr.mxu0 0.0
    %108 = vmatpush1.msra.mxu0 0.0
    %109 = vmatprep.subr.mxu0 0.0
    %110 = vmatpush1.msra.mxu0 0.0
    %111 = vmatprep.subr.mxu0 0.0
    %112 = vmatpush1.msra.mxu0 0.0
    %113 = vmatprep.subr.mxu0 0.0
    %114 = vmatpush1.msra.mxu0 0.0
    %115 = vmatprep.subr.mxu0 0.0
    %116 = vmatpush1.msra.mxu0 0.0
    %117 = vmatprep.subr.mxu0 0.0
    %118 = vmatpush1.msra.mxu0 0.0
    %119 = vmatprep.subr.mxu0 0.0
    %120 = vmatpush1.msra.mxu0 0.0
    %121 = vmatprep.subr.mxu0 0.0
    %122 = vmatpush1.msra.mxu0 0.0
    %123 = vmatprep.subr.mxu0 0.0
    %124 = vmatpush1.msra.mxu0 0.0
    %125 = vmatprep.subr.mxu0 0.0
    %126 = vmatpush1.msra.mxu0 0.0
    %127 = vmatprep.subr.mxu0 0.0
    %128 = vmatpush1.msra.mxu0 0.0
    %129 = vmatprep.subr.mxu0 0.0
    %130 = vmatpush1.msra.mxu0 0.0
    %131 = vmatprep.subr.mxu0 0.0
    %132 = vmatpush1.msra.mxu0 0.0
    %133 = vmatprep.mubr.f32.mxu0 0.0
    %134 = vmatmul.mubr.f32.gmra.mrb[0].mxu0 %v64
    %v135 = vpop.f32.mrb[0].mxu0
    %v136 = vadd.f32 0.0, %v135
    %v137 = vpop.f32.mrb[0].mxu0
    %138 = vmatprep.mubr.f32.mxu0 0.0
    %139 = vmatmul.mubr.f32.gmra.mrb[0].mxu0 %v67
    %v140 = vpop.f32.mrb[0].mxu0
    %v141 = vadd.f32 0.0, %v140
    %v142 = vpop.f32.mrb[0].mxu0
    %143 = vdwg.mxu0
    %v144 = vld [vmem:[#allocation5 + $0x8] sm:$0xff]
    %v145 = vld [vmem:[#allocation5 + $0x18] sm:$0xff]
    %v146 = vld [vmem:[#allocation5 + $0x28] sm:$0xff]
    %v147 = vld [vmem:[#allocation5 + $0x38] sm:$0xff]
    %148 = vmatprep.subr.mxu0 0.0
    %149 = vmatpush1.msra.mxu0 %v144
    %150 = vmatprep.subr.mxu0 0.0
    %151 = vmatpush1.msra.mxu0 %v145
    %152 = vmatprep.subr.mxu0 0.0
    %153 = vmatpush1.msra.mxu0 %v146
    %154 = vmatprep.subr.mxu0 0.0
    %155 = vmatpush1.msra.mxu0 %v147
    %156 = vmatprep.subr.mxu0 0.0
    %157 = vmatpush1.msra.mxu0 0.0
    %158 = vmatprep.subr.mxu0 0.0
    %159 = vmatpush1.msra.mxu0 0.0
    %160 = vmatprep.subr.mxu0 0.0
    %161 = vmatpush1.msra.mxu0 0.0
    %162 = vmatprep.subr.mxu0 0.0
    %163 = vmatpush1.msra.mxu0 0.0
    %164 = vmatprep.subr.mxu0 0.0
    %165 = vmatpush1.msra.mxu0 0.0
    %166 = vmatprep.subr.mxu0 0.0
    %167 = vmatpush1.msra.mxu0 0.0
    %168 = vmatprep.subr.mxu0 0.0
    %169 = vmatpush1.msra.mxu0 0.0
    %170 = vmatprep.subr.mxu0 0.0
    %171 = vmatpush1.msra.mxu0 0.0
    %172 = vmatprep.subr.mxu0 0.0
    %173 = vmatpush1.msra.mxu0 0.0
    %174 = vmatprep.subr.mxu0 0.0
    %175 = vmatpush1.msra.mxu0 0.0
    %176 = vmatprep.subr.mxu0 0.0
    %177 = vmatpush1.msra.mxu0 0.0
    %178 = vmatprep.subr.mxu0 0.0
    %179 = vmatpush1.msra.mxu0 0.0
    %180 = vmatprep.subr.mxu0 0.0
    %181 = vmatpush1.msra.mxu0 0.0
    %182 = vmatprep.subr.mxu0 0.0
    %183 = vmatpush1.msra.mxu0 0.0
    %184 = vmatprep.subr.mxu0 0.0
    %185 = vmatpush1.msra.mxu0 0.0
    %186 = vmatprep.subr.mxu0 0.0
    %187 = vmatpush1.msra.mxu0 0.0
    %188 = vmatprep.subr.mxu0 0.0
    %189 = vmatpush1.msra.mxu0 0.0
    %190 = vmatprep.subr.mxu0 0.0
    %191 = vmatpush1.msra.mxu0 0.0
    %192 = vmatprep.subr.mxu0 0.0
    %193 = vmatpush1.msra.mxu0 0.0
    %194 = vmatprep.subr.mxu0 0.0
    %195 = vmatpush1.msra.mxu0 0.0
    %196 = vmatprep.subr.mxu0 0.0
    %197 = vmatpush1.msra.mxu0 0.0
    %198 = vmatprep.subr.mxu0 0.0
    %199 = vmatpush1.msra.mxu0 0.0
    %200 = vmatprep.subr.mxu0 0.0
    %201 = vmatpush1.msra.mxu0 0.0
    %202 = vmatprep.subr.mxu0 0.0
    %203 = vmatpush1.msra.mxu0 0.0
    %204 = vmatprep.subr.mxu0 0.0
    %205 = vmatpush1.msra.mxu0 0.0
    %206 = vmatprep.subr.mxu0 0.0
    %207 = vmatpush1.msra.mxu0 0.0
    %208 = vmatprep.subr.mxu0 0.0
    %209 = vmatpush1.msra.mxu0 0.0
    %210 = vmatprep.subr.mxu0 0.0
    %211 = vmatpush1.msra.mxu0 0.0
    %212 = vmatprep.mubr.f32.mxu0 0.0
    %213 = vmatmul.mubr.f32.gmra.mrb[0].mxu0 %v64
    %v214 = vpop.f32.mrb[0].mxu0
    %v215 = vadd.f32 0.0, %v214
    %v216 = vpop.f32.mrb[0].mxu0
    %217 = vmatprep.mubr.f32.mxu0 0.0
    %218 = vmatmul.mubr.f32.gmra.mrb[0].mxu0 %v67
    %v219 = vpop.f32.mrb[0].mxu0
    %v220 = vadd.f32 0.0, %v219
    %v221 = vpop.f32.mrb[0].mxu0
    %222 = vdwg.mxu0
    %v223 = vxor.u32 %v136, 2147483648
    %v224 = vxor.u32 %v141, 2147483648
    %v225 = vmul.f32 %v223, 1.442695
    %v226 = vpow.pop %v225
    %v227 = vmul.f32 %v224, 1.442695
    %v228 = vpow.pop %v227
    %v229 = vadd.f32 %v226, 1.0
    %v230 = vadd.f32 %v228, 1.0
    %v231 = vrcp.pop %v229
    %v232 = vmul.f32 1.0, %v231
    %v233 = vrcp.pop %v230
    %v234 = vmul.f32 1.0, %v233
    %v235 = vmul.f32 %v136, %v232
    %v236 = vmul.f32 %v141, %v234
    %v237 = vmul.f32 %v215, %v235
    %v238 = vmul.f32 %v220, %v236
    %v239 = vld [vmem:[#allocation7] sm:$0xff]
    %v240 = vld [vmem:[#allocation7 + $0x8] sm:$0xff]
    %v241 = vld [vmem:[#allocation7 + $0x10] sm:$0xff]
    %v242 = vld [vmem:[#allocation7 + $0x18] sm:$0xff]
    %v243 = vld [vmem:[#allocation7 + $0x20] sm:$0xff]
    %v244 = vld [vmem:[#allocation7 + $0x28] sm:$0xff]
    %v245 = vld [vmem:[#allocation7 + $0x30] sm:$0xff]
    %v246 = vld [vmem:[#allocation7 + $0x38] sm:$0xff]
    %v247 = vld [vmem:[#allocation7 + $0x40] sm:$0xff]
    %v248 = vld [vmem:[#allocation7 + $0x48] sm:$0xff]
    %v249 = vld [vmem:[#allocation7 + $0x50] sm:$0xff]
    %v250 = vld [vmem:[#allocation7 + $0x58] sm:$0xff]
    %v251 = vld [vmem:[#allocation7 + $0x60] sm:$0xff]
    %v252 = vld [vmem:[#allocation7 + $0x68] sm:$0xff]
    %v253 = vld [vmem:[#allocation7 + $0x70] sm:$0xff]
    %v254 = vld [vmem:[#allocation7 + $0x78] sm:$0xff]
    %255 = vmatprep.subr.mxu0 0.0
    %256 = vmatpush1.msra.mxu0 %v239
    %257 = vmatprep.subr.mxu0 0.0
    %258 = vmatpush1.msra.mxu0 %v240
    %259 = vmatprep.subr.mxu0 0.0
    %260 = vmatpush1.msra.mxu0 %v241
    %261 = vmatprep.subr.mxu0 0.0
    %262 = vmatpush1.msra.mxu0 %v242
    %263 = vmatprep.subr.mxu0 0.0
    %264 = vmatpush1.msra.mxu0 %v243
    %265 = vmatprep.subr.mxu0 0.0
    %266 = vmatpush1.msra.mxu0 %v244
    %267 = vmatprep.subr.mxu0 0.0
    %268 = vmatpush1.msra.mxu0 %v245
    %269 = vmatprep.subr.mxu0 0.0
    %270 = vmatpush1.msra.mxu0 %v246
    %271 = vmatprep.subr.mxu0 0.0
    %272 = vmatpush1.msra.mxu0 %v247
    %273 = vmatprep.subr.mxu0 0.0
    %274 = vmatpush1.msra.mxu0 %v248
    %275 = vmatprep.subr.mxu0 0.0
    %276 = vmatpush1.msra.mxu0 %v249
    %277 = vmatprep.subr.mxu0 0.0
    %278 = vmatpush1.msra.mxu0 %v250
    %279 = vmatprep.subr.mxu0 0.0
    %280 = vmatpush1.msra.mxu0 %v251
    %281 = vmatprep.subr.mxu0 0.0
    %282 = vmatpush1.msra.mxu0 %v252
    %283 = vmatprep.subr.mxu0 0.0
    %284 = vmatpush1.msra.mxu0 %v253
    %285 = vmatprep.subr.mxu0 0.0
    %286 = vmatpush1.msra.mxu0 %v254
    %287 = vmatprep.subr.mxu0 0.0
    %288 = vmatpush1.msra.mxu0 0.0
    %289 = vmatprep.subr.mxu0 0.0
    %290 = vmatpush1.msra.mxu0 0.0
    %291 = vmatprep.subr.mxu0 0.0
    %292 = vmatpush1.msra.mxu0 0.0
    %293 = vmatprep.subr.mxu0 0.0
    %294 = vmatpush1.msra.mxu0 0.0
    %295 = vmatprep.subr.mxu0 0.0
    %296 = vmatpush1.msra.mxu0 0.0
    %297 = vmatprep.subr.mxu0 0.0
    %298 = vmatpush1.msra.mxu0 0.0
    %299 = vmatprep.subr.mxu0 0.0
    %300 = vmatpush1.msra.mxu0 0.0
    %301 = vmatprep.subr.mxu0 0.0
    %302 = vmatpush1.msra.mxu0 0.0
    %303 = vmatprep.subr.mxu0 0.0
    %304 = vmatpush1.msra.mxu0 0.0
    %305 = vmatprep.subr.mxu0 0.0
    %306 = vmatpush1.msra.mxu0 0.0
    %307 = vmatprep.subr.mxu0 0.0
    %308 = vmatpush1.msra.mxu0 0.0
    %309 = vmatprep.subr.mxu0 0.0
    %310 = vmatpush1.msra.mxu0 0.0
    %311 = vmatprep.subr.mxu0 0.0
    %312 = vmatpush1.msra.mxu0 0.0
    %313 = vmatprep.subr.mxu0 0.0
    %314 = vmatpush1.msra.mxu0 0.0
    %315 = vmatprep.subr.mxu0 0.0
    %316 = vmatpush1.msra.mxu0 0.0
    %317 = vmatprep.subr.mxu0 0.0
    %318 = vmatpush1.msra.mxu0 0.0
    %319 = vmatprep.mubr.f32.mxu0 0.0
    %320 = vmatmul.mubr.f32.gmra.mrb[0].mxu0 %v237
    %v321 = vpop.f32.mrb[0].mxu0
    %v322 = vadd.f32 0.0, %v321
    %v323 = vpop.f32.mrb[0].mxu0
    %324 = vmatprep.mubr.f32.mxu0 0.0
    %325 = vmatmul.mubr.f32.gmra.mrb[0].mxu0 %v238
    %v326 = vpop.f32.mrb[0].mxu0
    %v327 = vadd.f32 0.0, %v326
    %v328 = vpop.f32.mrb[0].mxu0
    %329 = vdwg.mxu0
    %330 = vst [vmem:[#allocation8] sm:$0xff] %v322
    %331 = vst [vmem:[#allocation8 + $0x8] sm:$0xff] %v327
    // Predicated region
    $region26: #{tpu_custom_call.1} parent=1 // pred_check
      _
    $region27: #{tpu_custom_call.1} parent=1 // pred_check_branch
      %333 = sbr.rel (0) target = $region29
    $region28: #{tpu_custom_call.1} parent=1 // pred_region
      %s335 = ssub.s32 256, 256
      %336 = vsyncadd [#allocation4], %s335
      %s337 = sshll.u32 [#allocation8], 4
      %s338 = int_to_ptr.vmem [resolvable:$true] %s337
      %343 = dma.vmem_to_hbm [thread:$0]  %s338, 256, %s3, [#allocation4], 128, 128, 8
    $region29: #{tpu_custom_call.1} parent=1 // pred_fallthru
      _
    // Predicated region
    $region30: #{tpu_custom_call.1} parent=1 // pred_check
      _
    $region31: #{tpu_custom_call.1} parent=1 // pred_check_branch
      %345 = sbr.rel (0) target = $region33
    $region32: #{tpu_custom_call.1} parent=1 // pred_region
      %346 = dma.done [#allocation4], 256
    $region33: #{tpu_custom_call.1} parent=1 // pred_fallthru
      _
    %347 = vsyncpa [#allocation3], 1
    %348 = vsyncpa [#allocation6], 1
    %349 = vsyncpa [#allocation4], 1

</llo_original>
